<compile_context>
chip_gen: v7x
topology: tpu7x:2x2x1
jax: 0.10.0
libtpu: 0.0.40
codegen_flags: <defaults>
</compile_context>

<pallas_src>
import functools

import jax
import jax.numpy as jnp
from jax import lax
from jax.experimental import pallas as pl
from jax.experimental.pallas import tpu as pltpu


def _round_up(n, m):
    return ((n + m - 1) // m) * m


def _relu_in_bf16():
    """bf16 ReLU only on chips with a bf16 VALU (v6e / v7x); f32 ReLU on v5-class."""
    try:
        kind = jax.devices()[0].device_kind.lower()
    except Exception:
        return True
    return not any(tag in kind for tag in ("v2", "v3", "v4", "v5"))


def _pick_tiles(B, *, cap=16384, chunk=2048):
    """Return (block_n, chunk_n): lanes per grid step and lanes per in-kernel sub-chunk."""
    bn_small = _round_up(B, 128)
    if bn_small <= chunk:
        return bn_small, bn_small          # tiny batch: single step, chunk == block
    # >= 2 grid steps (v7x megacore), block a multiple of chunk, capped for VMEM/pipelining.
    bn = _round_up(max(chunk, (B + 1) // 2), chunk)
    return min(bn, cap), chunk


def mlp_kernel(x_ref, w1a_ref, w2_ref, b2_ref, w3_ref, b3_ref, o_ref,
               *, chunk_n, relu_bf16):
    """x_ref: (4, block_n) f32; w1a: (64, 5) f32 (bias folded as 5th column);
    w2: (64, 64) bf16; b2: (64, 1) f32; w3: (2, 64) bf16; b3: (2, 1) f32;
    o_ref: (2, block_n) f32."""
    n_chunks = x_ref.shape[1] // chunk_n
    ones_row = jnp.ones((1, chunk_n), jnp.float32)      # hoisted out of the chunk loop
    w1a = w1a_ref[...]
    w2 = w2_ref[...]
    b2 = b2_ref[...]
    w3 = w3_ref[...]
    b3 = b3_ref[...]

    def compute_chunk(off):
        x = x_ref[:, pl.ds(off, chunk_n)]                       # (4, cn) f32
        x5 = jnp.concatenate([x, ones_row], axis=0)             # (5, cn); ones row -> bias
        # Layer 1 in f32 (tiny K, MXU essentially free); bias folded into w1a.
        h1 = jnp.dot(w1a, x5, preferred_element_type=jnp.float32)        # (64, cn) f32
        if relu_bf16:
            h1 = jnp.maximum(h1.astype(jnp.bfloat16), 0)        # bf16 VALU (v6e/v7x)
        else:
            h1 = jnp.maximum(h1, 0.0).astype(jnp.bfloat16)      # f32 VALU (v5-class)
        h2 = jnp.dot(w2, h1, preferred_element_type=jnp.float32) + b2    # (64, cn) f32
        if relu_bf16:
            h2 = jnp.maximum(h2.astype(jnp.bfloat16), 0)
        else:
            h2 = jnp.maximum(h2, 0.0).astype(jnp.bfloat16)
        out = jnp.dot(w3, h2, preferred_element_type=jnp.float32) + b3   # (2, cn) f32
        o_ref[:, pl.ds(off, chunk_n)] = out.astype(o_ref.dtype)          # lane-dense store

    if n_chunks == 1:
        compute_chunk(0)
    else:
        def body(c, carry):
            compute_chunk(pl.multiple_of(c * chunk_n, chunk_n))
            return carry
        lax.fori_loop(0, n_chunks, body, 0)


def factor_relation_forward_t(x_t, params, *, block_cap=16384, chunk_n=2048):
    """Preferred layout: x_t (4, B) f32 -> (2, B) f32 (no wrapper transpose passes)."""
    w1a, w2, b2, w3, b3 = params
    Fin, B = x_t.shape
    H1 = w2.shape[1]
    H2 = w2.shape[0]
    Fout = w3.shape[0]

    bn, cn = _pick_tiles(B, cap=block_cap, chunk=chunk_n)
    B_pad = _round_up(B, bn)
    if B_pad != B:
        x_t = jnp.pad(x_t, ((0, 0), (0, B_pad - B)))

    grid = (B_pad // bn,)
    kernel = functools.partial(mlp_kernel, chunk_n=cn, relu_bf16=_relu_in_bf16())

    in_specs = [
        pl.BlockSpec((Fin, bn), lambda i: (0, i)),          # x tile: batch on lanes
        pl.BlockSpec((H1, Fin + 1), lambda i: (0, 0)),      # weights/biases: constant
        pl.BlockSpec((H2, H1), lambda i: (0, 0)),           #   block index -> DMA'd once,
        pl.BlockSpec((H2, 1), lambda i: (0, 0)),            #   resident across grid steps
        pl.BlockSpec((Fout, H2), lambda i: (0, 0)),
        pl.BlockSpec((Fout, 1), lambda i: (0, 0)),
    ]
    out_specs = pl.BlockSpec((Fout, bn), lambda i: (0, i))

    out_t = pl.pallas_call(
        kernel,
        out_shape=jax.ShapeDtypeStruct((Fout, B_pad), jnp.float32),
        grid_spec=pltpu.PrefetchScalarGridSpec(
            num_scalar_prefetch=0,
            grid=grid,
            in_specs=in_specs,
            out_specs=out_specs,
        ),
        compiler_params=pltpu.CompilerParams(
            dimension_semantics=("parallel",),              # megacore-shardable on v7x
            vmem_limit_bytes=32 * 1024 * 1024,              # safe on v5e/v6e/v7x
        ),
    )(x_t, w1a, w2, b2, w3, b3)

    return out_t[:, :B] if B_pad != B else out_t


def factor_relation_forward(x, params, **kw):
    """PyTorch-layout compat wrapper: x (B, 4) -> (B, 2).
    The transposes here are extra XLA HBM passes; producers/consumers that can work in
    the (features, batch) layout should call factor_relation_forward_t directly."""
    return factor_relation_forward_t(x.T, params, **kw).T


def init_params(key):
    """nn.Linear-shaped params. Layer-1 weight kept f32 with bias folded as a 5th column
    (the kernel contracts it against an in-kernel ones row); layers 2/3 weights bf16."""
    k1, k2, k3, k4, k5, k6 = jax.random.split(key, 6)
    s1 = 1.0 / jnp.sqrt(4.0)
    s2 = 1.0 / jnp.sqrt(64.0)
    w1 = jax.random.uniform(k1, (64, 4), jnp.float32, -s1, s1)
    b1 = jax.random.uniform(k2, (64, 1), jnp.float32, -s1, s1)
    w1a = jnp.concatenate([w1, b1], axis=1)                       # (64, 5) f32
    w2 = jax.random.uniform(k3, (64, 64), jnp.float32, -s2, s2).astype(jnp.bfloat16)
    b2 = jax.random.uniform(k4, (64, 1), jnp.float32, -s2, s2)
    w3 = jax.random.uniform(k5, (2, 64), jnp.float32, -s2, s2).astype(jnp.bfloat16)
    b3 = jax.random.uniform(k6, (2, 1), jnp.float32, -s2, s2)
    return (w1a, w2, b2, w3, b3)


def reference_forward(x, params):
    w1a, w2, b2, w3, b3 = params
    w1 = w1a[:, :4]
    b1 = w1a[:, 4]
    h1 = jnp.maximum(x @ w1.T + b1, 0.0)
    h2 = jnp.maximum(h1 @ w2.astype(jnp.float32).T + b2[:, 0], 0.0)
    return h2 @ w3.astype(jnp.float32).T + b3[:, 0]


if __name__ == "__main__":
    key = jax.random.PRNGKey(0)
    kx, kx2, kp = jax.random.split(key, 3)
    params = init_params(kp)

    # Small demo batch through the PyTorch-layout compat wrapper (single grid step).
    B = 256
    x = jax.random.normal(kx, (B, 4), dtype=jnp.float32)
    out = jax.block_until_ready(factor_relation_forward(x, params))
    ref = reference_forward(x, params)
    assert out.shape == (B, 2)
    # bf16 operands in layers 2/3 -> looser tolerance than a pure-f32 path.
    assert jnp.allclose(out, ref, atol=5e-2, rtol=5e-2)

    # Ragged batch through the preferred transposed entry point (pad/unpad path).
    B2 = 33
    x2_t = jax.random.normal(kx2, (4, B2), dtype=jnp.float32)
    out2_t = jax.block_until_ready(factor_relation_forward_t(x2_t, params))
    ref2 = reference_forward(x2_t.T, params)
    assert out2_t.shape == (2, B2)
    assert jnp.allclose(out2_t.T, ref2, atol=5e-2, rtol=5e-2)

    print("KERNEL_OK")
</pallas_src>

<mosaic_0001>
module attributes {stable_mosaic.version = 11 : i64} {
  func.func @mlp_kernel(%arg0: i32, %arg1: memref<4x256xf32, #tpu.memory_space<vmem>>, %arg2: memref<64x5xf32, #tpu.memory_space<vmem>>, %arg3: memref<64x64xbf16, #tpu.memory_space<vmem>>, %arg4: memref<64x1xf32, #tpu.memory_space<vmem>>, %arg5: memref<2x64xbf16, #tpu.memory_space<vmem>>, %arg6: memref<2x1xf32, #tpu.memory_space<vmem>>, %arg7: memref<2x256xf32, #tpu.memory_space<vmem>>) attributes {dimension_semantics = [#tpu.dimension_semantics<parallel>], iteration_bounds = array<i64: 1>, scalar_prefetch = 0 : i64, scratch_operands = 0 : i64, tpu.core_type = #tpu.core_type<tc>, window_params = [{transform_indices = @transform_0, window_bounds = array<i64: 4, 256>}, {pipeline_mode = #tpu.pipeline_mode<synchronous>, transform_indices = @transform_1, window_bounds = array<i64: 64, 5>}, {pipeline_mode = #tpu.pipeline_mode<synchronous>, transform_indices = @transform_2, window_bounds = array<i64: 64, 64>}, {pipeline_mode = #tpu.pipeline_mode<synchronous>, transform_indices = @transform_3, window_bounds = array<i64: 64, 1>}, {pipeline_mode = #tpu.pipeline_mode<synchronous>, transform_indices = @transform_4, window_bounds = array<i64: 2, 64>}, {pipeline_mode = #tpu.pipeline_mode<synchronous>, transform_indices = @transform_5, window_bounds = array<i64: 2, 1>}, {transform_indices = @transform_6, window_bounds = array<i64: 2, 256>}]} {
    %cst = arith.constant 1.000000e+00 : f32
    %0 = vector.broadcast %cst : f32 to vector<1x256xf32>
    %c0 = arith.constant 0 : index
    %c0_0 = arith.constant 0 : index
    %1 = vector.load %arg2[%c0, %c0_0] : memref<64x5xf32, #tpu.memory_space<vmem>>, vector<64x5xf32>
    %c0_1 = arith.constant 0 : index
    %c0_2 = arith.constant 0 : index
    %2 = vector.load %arg3[%c0_1, %c0_2] : memref<64x64xbf16, #tpu.memory_space<vmem>>, vector<64x64xbf16>
    %c0_3 = arith.constant 0 : index
    %c0_4 = arith.constant 0 : index
    %3 = vector.load %arg4[%c0_3, %c0_4] : memref<64x1xf32, #tpu.memory_space<vmem>>, vector<64x1xf32>
    %c0_5 = arith.constant 0 : index
    %c0_6 = arith.constant 0 : index
    %4 = vector.load %arg5[%c0_5, %c0_6] : memref<2x64xbf16, #tpu.memory_space<vmem>>, vector<2x64xbf16>
    %c0_7 = arith.constant 0 : index
    %c0_8 = arith.constant 0 : index
    %5 = vector.load %arg6[%c0_7, %c0_8] : memref<2x1xf32, #tpu.memory_space<vmem>>, vector<2x1xf32>
    %c0_9 = arith.constant 0 : index
    %c0_10 = arith.constant 0 : index
    %6 = vector.load %arg1[%c0_9, %c0_10] : memref<4x256xf32, #tpu.memory_space<vmem>>, vector<4x256xf32>
    %7 = tpu.concatenate %6, %0 in 0 : vector<4x256xf32>, vector<1x256xf32> -> vector<5x256xf32>
    %cst_11 = arith.constant dense<0.000000e+00> : vector<64x256xf32>
    %8 = tpu.matmul %1, %7, %cst_11 {dimension_numbers = #tpu.dot_dimension_numbers<[1], [0], [0], [1], [0, 0, 1, 1], [], []>} : vector<64x5xf32>, vector<5x256xf32>, vector<64x256xf32> -> vector<64x256xf32>
    %9 = arith.truncf %8 : vector<64x256xf32> to vector<64x256xbf16>
    %cst_12 = arith.constant 0.000000e+00 : bf16
    %10 = vector.broadcast %cst_12 : bf16 to vector<64x256xbf16>
    %11 = arith.maximumf %9, %10 : vector<64x256xbf16>
    %cst_13 = arith.constant dense<0.000000e+00> : vector<64x256xf32>
    %12 = tpu.matmul %2, %11, %cst_13 {dimension_numbers = #tpu.dot_dimension_numbers<[1], [0], [0], [1], [0, 0, 1, 1], [], []>} : vector<64x64xbf16>, vector<64x256xbf16>, vector<64x256xf32> -> vector<64x256xf32>
    %13 = vector.broadcast %3 : vector<64x1xf32> to vector<64x256xf32>
    %14 = arith.addf %12, %13 : vector<64x256xf32>
    %15 = arith.truncf %14 : vector<64x256xf32> to vector<64x256xbf16>
    %cst_14 = arith.constant 0.000000e+00 : bf16
    %16 = vector.broadcast %cst_14 : bf16 to vector<64x256xbf16>
    %17 = arith.maximumf %15, %16 : vector<64x256xbf16>
    %cst_15 = arith.constant dense<0.000000e+00> : vector<2x256xf32>
    %18 = tpu.matmul %4, %17, %cst_15 {dimension_numbers = #tpu.dot_dimension_numbers<[1], [0], [0], [1], [0, 0, 1, 1], [], []>} : vector<2x64xbf16>, vector<64x256xbf16>, vector<2x256xf32> -> vector<2x256xf32>
    %19 = vector.broadcast %5 : vector<2x1xf32> to vector<2x256xf32>
    %20 = arith.addf %18, %19 : vector<2x256xf32>
    %c0_16 = arith.constant 0 : index
    %c0_17 = arith.constant 0 : index
    %21 = vector.load %arg7[%c0_16, %c0_17] : memref<2x256xf32, #tpu.memory_space<vmem>>, vector<2x256xf32>
    tpu.vector_store %arg7[%c0_16, %c0_17], %20 {strides = array<i32>} : memref<2x256xf32, #tpu.memory_space<vmem>>, vector<2x256xf32>,
    return
  }
  func.func @transform_0(%arg0: i32) -> (i32, i32) {
    %c0_i32 = arith.constant 0 : i32
    %c0_i32_0 = arith.constant 0 : i32
    return %c0_i32, %arg0 : i32, i32
  }
  func.func @transform_1(%arg0: i32) -> (i32, i32) {
    %c0_i32 = arith.constant 0 : i32
    %c0_i32_0 = arith.constant 0 : i32
    %c0_i32_1 = arith.constant 0 : i32
    return %c0_i32, %c0_i32_0 : i32, i32
  }
  func.func @transform_2(%arg0: i32) -> (i32, i32) {
    %c0_i32 = arith.constant 0 : i32
    %c0_i32_0 = arith.constant 0 : i32
    %c0_i32_1 = arith.constant 0 : i32
    return %c0_i32, %c0_i32_0 : i32, i32
  }
  func.func @transform_3(%arg0: i32) -> (i32, i32) {
    %c0_i32 = arith.constant 0 : i32
    %c0_i32_0 = arith.constant 0 : i32
    %c0_i32_1 = arith.constant 0 : i32
    return %c0_i32, %c0_i32_0 : i32, i32
  }
  func.func @transform_4(%arg0: i32) -> (i32, i32) {
    %c0_i32 = arith.constant 0 : i32
    %c0_i32_0 = arith.constant 0 : i32
    %c0_i32_1 = arith.constant 0 : i32
    return %c0_i32, %c0_i32_0 : i32, i32
  }
  func.func @transform_5(%arg0: i32) -> (i32, i32) {
    %c0_i32 = arith.constant 0 : i32
    %c0_i32_0 = arith.constant 0 : i32
    %c0_i32_1 = arith.constant 0 : i32
    return %c0_i32, %c0_i32_0 : i32, i32
  }
  func.func @transform_6(%arg0: i32) -> (i32, i32) {
    %c0_i32 = arith.constant 0 : i32
    %c0_i32_0 = arith.constant 0 : i32
    return %c0_i32, %arg0 : i32, i32
  }
}

</mosaic_0001>

<llo_original>
// kernel: tpu_custom_call.1
$region0: #{tpu_custom_call.1}
  #allocation0 [shape = 'u32[]', space=smem, size = 0x4, offset = 0x4, fixed_abs, tag = 'smem constant byte address 0x4 - core index']
  #allocation1 [shape = 'u32[144,128]{1,0:T(1,128)}', space=vmem, size = 0x12000, scoped, tag = 'internal scratch']
  %s0 = inlined_call_operand.vmem [shape: f32[4,256], index: 0, kind: input, shape index: {}]
  %s1 = inlined_call_operand.vmem [shape: f32[64,5], index: 1, kind: input, shape index: {}]
  %s2 = inlined_call_operand.vmem [shape: bf16[64,64], index: 2, kind: input, shape index: {}]
  %s3 = inlined_call_operand.vmem [shape: f32[64,1], index: 3, kind: input, shape index: {}]
  %s4 = inlined_call_operand.vmem [shape: bf16[2,64], index: 4, kind: input, shape index: {}]
  %s5 = inlined_call_operand.vmem [shape: f32[2,1], index: 5, kind: input, shape index: {}]
  %s6 = inlined_call_operand.hbm [shape: f32[2,256], index: 6, kind: output, shape index: {}]
  %s7 = sld [smem:[#allocation0]]
  $region34: #{tpu_custom_call.1} parent=0
    _
  %s9 = ssub.s32 1, %s7
  %s10 = scalar_select 0, %s9, %s7
  $region1: #{tpu_custom_call.1} parent=0
    #allocation2 [shape = 'u8[2048]{0}', space=vmem, size = 0x800, scoped, tag = 'output window, operand 0, single buffered']
    #allocation3 [shape = 's32[1]{0}', space=sflag, size = 0x4, scoped, tag = 'scoped memory for tpu_custom_call.1']
    %11 = vsyncpa [#allocation3], 0
    // Predicated region
    $region2: #{tpu_custom_call.1} parent=1 // pred_check
      _
    $region3: #{tpu_custom_call.1} parent=1 // pred_check_branch
      %13 = sbr.rel (0) target = $region5
    $region4: #{tpu_custom_call.1} parent=1 // pred_region
      _
    $region5: #{tpu_custom_call.1} parent=1 // pred_fallthru
      _
    // Predicated region
    $region6: #{tpu_custom_call.1} parent=1 // pred_check
      _
    $region7: #{tpu_custom_call.1} parent=1 // pred_check_branch
      %15 = sbr.rel (0) target = $region9
    $region8: #{tpu_custom_call.1} parent=1 // pred_region
      _
    $region9: #{tpu_custom_call.1} parent=1 // pred_fallthru
      _
    // Predicated region
    $region10: #{tpu_custom_call.1} parent=1 // pred_check
      _
    $region11: #{tpu_custom_call.1} parent=1 // pred_check_branch
      %17 = sbr.rel (0) target = $region13
    $region12: #{tpu_custom_call.1} parent=1 // pred_region
      _
    $region13: #{tpu_custom_call.1} parent=1 // pred_fallthru
      _
    // Predicated region
    $region14: #{tpu_custom_call.1} parent=1 // pred_check
      _
    $region15: #{tpu_custom_call.1} parent=1 // pred_check_branch
      %19 = sbr.rel (0) target = $region17
    $region16: #{tpu_custom_call.1} parent=1 // pred_region
      _
    $region17: #{tpu_custom_call.1} parent=1 // pred_fallthru
      _
    // Predicated region
    $region18: #{tpu_custom_call.1} parent=1 // pred_check
      _
    $region19: #{tpu_custom_call.1} parent=1 // pred_check_branch
      %21 = sbr.rel (0) target = $region21
    $region20: #{tpu_custom_call.1} parent=1 // pred_region
      _
    $region21: #{tpu_custom_call.1} parent=1 // pred_fallthru
      _
    // Predicated region
    $region22: #{tpu_custom_call.1} parent=1 // pred_check
      _
    $region23: #{tpu_custom_call.1} parent=1 // pred_check_branch
      %23 = sbr.rel (0) target = $region25
    $region24: #{tpu_custom_call.1} parent=1 // pred_region
      _
    $region25: #{tpu_custom_call.1} parent=1 // pred_fallthru
      _
    %v25 = vld [vmem:[%s1] sm:$0xff]
    %v26 = vld [vmem:[%s1 + $0x8] sm:$0xff]
    %v27 = vld [vmem:[%s1 + $0x10] sm:$0xff]
    %v28 = vld [vmem:[%s1 + $0x18] sm:$0xff]
    %v29 = vld [vmem:[%s1 + $0x20] sm:$0xff]
    %v30 = vld [vmem:[%s1 + $0x28] sm:$0xff]
    %v31 = vld [vmem:[%s1 + $0x30] sm:$0xff]
    %v32 = vld [vmem:[%s1 + $0x38] sm:$0xff]
    %v33 = vld [vmem:[%s2] sm:$0xf]
    %v34 = vld [vmem:[%s2 + $0x4] sm:$0xf]
    %v35 = vld [vmem:[%s2 + $0x8] sm:$0xf]
    %v36 = vld [vmem:[%s2 + $0xc] sm:$0xf]
    %v37 = vld [vmem:[%s2 + $0x10] sm:$0xf]
    %v38 = vld [vmem:[%s2 + $0x14] sm:$0xf]
    %v39 = vld [vmem:[%s2 + $0x18] sm:$0xf]
    %v40 = vld [vmem:[%s2 + $0x1c] sm:$0xf]
    %v41 = vld [vmem:[%s3] sm:$0xff]
    %v42 = vld [vmem:[%s3 + $0x8] sm:$0xff]
    %v43 = vld [vmem:[%s3 + $0x10] sm:$0xff]
    %v44 = vld [vmem:[%s3 + $0x18] sm:$0xff]
    %v45 = vld [vmem:[%s3 + $0x20] sm:$0xff]
    %v46 = vld [vmem:[%s3 + $0x28] sm:$0xff]
    %v47 = vld [vmem:[%s3 + $0x30] sm:$0xff]
    %v48 = vld [vmem:[%s3 + $0x38] sm:$0xff]
    %v49 = vld [vmem:[%s4] sm:$0x1]
    %v50 = vld [vmem:[%s5] sm:$0x3]
    %v51 = vld [vmem:[%s0] sm:$0xff]
    %v53 = vcombine.high %v51, %v51
    %vm55 = vcmask 1043456
    %v56 = vsel %vm55, %v51, 1.0
    %v57 = vsel %vm55, %v53, 1.0
    %vm58 = vcmask 39936
    %v60 = vsel %vm58, %v25, 0
    %v63 = vsel %vm58, %v26, 0
    %v66 = vsel %vm58, %v27, 0
    %v69 = vsel %vm58, %v28, 0
    %v72 = vsel %vm58, %v29, 0
    %v75 = vsel %vm58, %v30, 0
    %v78 = vsel %vm58, %v31, 0
    %v81 = vsel %vm58, %v32, 0
    %vm83 = vcmask 1044480
    %v85 = vsel %vm83, %v56, 0
    %v88 = vsel %vm83, %v57, 0
    %90 = vmatprep.subr.mxu0 %v88
    %91 = vmatpush1.msra.mxu0 %v85
    %92 = vmatprep.subr.mxu0 0.0
    %93 = vmatpush1.msra.mxu0 0.0
    %94 = vmatprep.subr.mxu0 0.0
    %95 = vmatpush1.msra.mxu0 0.0
    %96 = vmatprep.subr.mxu0 0.0
    %97 = vmatpush1.msra.mxu0 0.0
    %98 = vmatprep.subr.mxu0 0.0
    %99 = vmatpush1.msra.mxu0 0.0
    %100 = vmatprep.subr.mxu0 0.0
    %101 = vmatpush1.msra.mxu0 0.0
    %102 = vmatprep.subr.mxu0 0.0
    %103 = vmatpush1.msra.mxu0 0.0
    %104 = vmatprep.subr.mxu0 0.0
    %105 = vmatpush1.msra.mxu0 0.0
    %106 = vmatprep.subr.mxu0 0.0
    %107 = vmatpush1.msra.mxu0 0.0
    %108 = vmatprep.subr.mxu0 0.0
    %109 = vmatpush1.msra.mxu0 0.0
    %110 = vmatprep.subr.mxu0 0.0
    %111 = vmatpush1.msra.mxu0 0.0
    %112 = vmatprep.subr.mxu0 0.0
    %113 = vmatpush1.msra.mxu0 0.0
    %114 = vmatprep.subr.mxu0 0.0
    %115 = vmatpush1.msra.mxu0 0.0
    %116 = vmatprep.subr.mxu0 0.0
    %117 = vmatpush1.msra.mxu0 0.0
    %118 = vmatprep.subr.mxu0 0.0
    %119 = vmatpush1.msra.mxu0 0.0
    %120 = vmatprep.subr.mxu0 0.0
    %121 = vmatpush1.msra.mxu0 0.0
    %122 = vmatprep.subr.mxu0 0.0
    %123 = vmatpush1.msra.mxu0 0.0
    %124 = vmatprep.subr.mxu0 0.0
    %125 = vmatpush1.msra.mxu0 0.0
    %126 = vmatprep.subr.mxu0 0.0
    %127 = vmatpush1.msra.mxu0 0.0
    %128 = vmatprep.subr.mxu0 0.0
    %129 = vmatpush1.msra.mxu0 0.0
    %130 = vmatprep.subr.mxu0 0.0
    %131 = vmatpush1.msra.mxu0 0.0
    %132 = vmatprep.subr.mxu0 0.0
    %133 = vmatpush1.msra.mxu0 0.0
    %134 = vmatprep.subr.mxu0 0.0
    %135 = vmatpush1.msra.mxu0 0.0
    %136 = vmatprep.subr.mxu0 0.0
    %137 = vmatpush1.msra.mxu0 0.0
    %138 = vmatprep.subr.mxu0 0.0
    %139 = vmatpush1.msra.mxu0 0.0
    %140 = vmatprep.subr.mxu0 0.0
    %141 = vmatpush1.msra.mxu0 0.0
    %142 = vmatprep.subr.mxu0 0.0
    %143 = vmatpush1.msra.mxu0 0.0
    %144 = vmatprep.subr.mxu0 0.0
    %145 = vmatpush1.msra.mxu0 0.0
    %146 = vmatprep.subr.mxu0 0.0
    %147 = vmatpush1.msra.mxu0 0.0
    %148 = vmatprep.subr.mxu0 0.0
    %149 = vmatpush1.msra.mxu0 0.0
    %150 = vmatprep.subr.mxu0 0.0
    %151 = vmatpush1.msra.mxu0 0.0
    %152 = vmatprep.subr.mxu0 0.0
    %153 = vmatpush1.msra.mxu0 0.0
    %154 = vmatprep.mubr.f32.mxu0 0.0
    %155 = vmatmul.mubr.f32.gmra.mrb[0].mxu0 %v60
    %v156 = vpop.f32.mrb[0].mxu0
    %v157 = vadd.f32 0.0, %v156
    %v158 = vpop.f32.mrb[0].mxu0
    %v159 = vadd.f32 0.0, %v158
    %160 = vmatprep.mubr.f32.mxu0 0.0
    %161 = vmatmul.mubr.f32.gmra.mrb[0].mxu0 %v63
    %v162 = vpop.f32.mrb[0].mxu0
    %v163 = vadd.f32 0.0, %v162
    %v164 = vpop.f32.mrb[0].mxu0
    %v165 = vadd.f32 0.0, %v164
    %166 = vmatprep.mubr.f32.mxu0 0.0
    %167 = vmatmul.mubr.f32.gmra.mrb[0].mxu0 %v66
    %v168 = vpop.f32.mrb[0].mxu0
    %v169 = vadd.f32 0.0, %v168
    %v170 = vpop.f32.mrb[0].mxu0
    %v171 = vadd.f32 0.0, %v170
    %172 = vmatprep.mubr.f32.mxu0 0.0
    %173 = vmatmul.mubr.f32.gmra.mrb[0].mxu0 %v69
    %v174 = vpop.f32.mrb[0].mxu0
    %v175 = vadd.f32 0.0, %v174
    %v176 = vpop.f32.mrb[0].mxu0
    %v177 = vadd.f32 0.0, %v176
    %178 = vmatprep.mubr.f32.mxu0 0.0
    %179 = vmatmul.mubr.f32.gmra.mrb[0].mxu0 %v72
    %v180 = vpop.f32.mrb[0].mxu0
    %v181 = vadd.f32 0.0, %v180
    %v182 = vpop.f32.mrb[0].mxu0
    %v183 = vadd.f32 0.0, %v182
    %184 = vmatprep.mubr.f32.mxu0 0.0
    %185 = vmatmul.mubr.f32.gmra.mrb[0].mxu0 %v75
    %v186 = vpop.f32.mrb[0].mxu0
    %v187 = vadd.f32 0.0, %v186
    %v188 = vpop.f32.mrb[0].mxu0
    %v189 = vadd.f32 0.0, %v188
    %190 = vmatprep.mubr.f32.mxu0 0.0
    %191 = vmatmul.mubr.f32.gmra.mrb[0].mxu0 %v78
    %v192 = vpop.f32.mrb[0].mxu0
    %v193 = vadd.f32 0.0, %v192
    %v194 = vpop.f32.mrb[0].mxu0
    %v195 = vadd.f32 0.0, %v194
    %196 = vmatprep.mubr.f32.mxu0 0.0
    %197 = vmatmul.mubr.f32.gmra.mrb[0].mxu0 %v81
    %v198 = vpop.f32.mrb[0].mxu0
    %v199 = vadd.f32 0.0, %v198
    %v200 = vpop.f32.mrb[0].mxu0
    %v201 = vadd.f32 0.0, %v200
    %202 = vdwg.mxu0
    %v203 = vpack.c.bf16 %v163, %v157
    %v204 = vpack.c.bf16 %v165, %v159
    %v205 = vpack.c.bf16 %v175, %v169
    %v206 = vpack.c.bf16 %v177, %v171
    %v207 = vpack.c.bf16 %v187, %v181
    %v208 = vpack.c.bf16 %v189, %v183
    %v209 = vpack.c.bf16 %v199, %v193
    %v210 = vpack.c.bf16 %v201, %v195
    %v211 = vmax.bf16 %v203, 0
    %v212 = vmax.bf16 %v204, 0
    %v213 = vmax.bf16 %v205, 0
    %v214 = vmax.bf16 %v206, 0
    %v215 = vmax.bf16 %v207, 0
    %v216 = vmax.bf16 %v208, 0
    %v217 = vmax.bf16 %v209, 0
    %v218 = vmax.bf16 %v210, 0
    %220 = vset.pattern.permute.xlu0 0
    %221 = vperm.xlu0 %220, %v41
    %v222 = vpop.permute.xlu0 %221
    %225 = vset.pattern.permute.xlu0 0
    %226 = vperm.xlu0 %225, %v42
    %v227 = vpop.permute.xlu0 %226
    %230 = vset.pattern.permute.xlu0 0
    %231 = vperm.xlu0 %230, %v43
    %v232 = vpop.permute.xlu0 %231
    %235 = vset.pattern.permute.xlu0 0
    %236 = vperm.xlu0 %235, %v44
    %v237 = vpop.permute.xlu0 %236
    %240 = vset.pattern.permute.xlu0 0
    %241 = vperm.xlu0 %240, %v45
    %v242 = vpop.permute.xlu0 %241
    %245 = vset.pattern.permute.xlu0 0
    %246 = vperm.xlu0 %245, %v46
    %v247 = vpop.permute.xlu0 %246
    %250 = vset.pattern.permute.xlu0 0
    %251 = vperm.xlu0 %250, %v47
    %v252 = vpop.permute.xlu0 %251
    %255 = vset.pattern.permute.xlu0 0
    %256 = vperm.xlu0 %255, %v48
    %v257 = vpop.permute.xlu0 %256
    %v267 = vunpack.c.l.b16 %v33
    %v268 = vunpack.c.l.b16 %v34
    %v269 = vunpack.c.l.b16 %v35
    %v270 = vunpack.c.l.b16 %v36
    %v271 = vunpack.c.l.b16 %v37
    %v272 = vunpack.c.l.b16 %v38
    %v273 = vunpack.c.l.b16 %v39
    %v274 = vunpack.c.l.b16 %v40
    %v275 = vpack.c.b16 %v268, %v267
    %v276 = vpack.c.b16 %v270, %v269
    %v277 = vpack.c.b16 %v272, %v271
    %v278 = vpack.c.b16 %v274, %v273
    %vm279 = vcmask 523264
    %v281 = vsel %vm279, %v275, 0
    %v284 = vsel %vm279, %v276, 0
    %v287 = vsel %vm279, %v277, 0
    %v290 = vsel %vm279, %v278, 0
    %292 = vmatprep.subr.bf16.mxu0 %v212
    %293 = vmatpush1.bf16.msra.mxu0 %v211
    %294 = vmatprep.subr.bf16.mxu0 %v214
    %295 = vmatpush1.bf16.msra.mxu0 %v213
    %296 = vmatprep.subr.bf16.mxu0 %v216
    %297 = vmatpush1.bf16.msra.mxu0 %v215
    %298 = vmatprep.subr.bf16.mxu0 %v218
    %299 = vmatpush1.bf16.msra.mxu0 %v217
    %300 = vmatprep.subr.bf16.mxu0 0
    %301 = vmatpush1.bf16.msra.mxu0 0
    %302 = vmatprep.subr.bf16.mxu0 0
    %303 = vmatpush1.bf16.msra.mxu0 0
    %304 = vmatprep.subr.bf16.mxu0 0
    %305 = vmatpush1.bf16.msra.mxu0 0
    %306 = vmatprep.subr.bf16.mxu0 0
    %307 = vmatpush1.bf16.msra.mxu0 0
    %308 = vmatprep.subr.bf16.mxu0 0
    %309 = vmatpush1.bf16.msra.mxu0 0
    %310 = vmatprep.subr.bf16.mxu0 0
    %311 = vmatpush1.bf16.msra.mxu0 0
    %312 = vmatprep.subr.bf16.mxu0 0
    %313 = vmatpush1.bf16.msra.mxu0 0
    %314 = vmatprep.subr.bf16.mxu0 0
    %315 = vmatpush1.bf16.msra.mxu0 0
    %316 = vmatprep.subr.bf16.mxu0 0
    %317 = vmatpush1.bf16.msra.mxu0 0
    %318 = vmatprep.subr.bf16.mxu0 0
    %319 = vmatpush1.bf16.msra.mxu0 0
    %320 = vmatprep.subr.bf16.mxu0 0
    %321 = vmatpush1.bf16.msra.mxu0 0
    %322 = vmatprep.subr.bf16.mxu0 0
    %323 = vmatpush1.bf16.msra.mxu0 0
    %324 = vmatprep.mubr.bf16.mxu0 0
    %325 = vmatmul.mubr.bf16.gmra.mrb[0].mxu0 %v281
    %v326 = vpop.f32.mrb[0].mxu0
    %v327 = vadd.f32 %v222, %v326
    %v328 = vpop.f32.mrb[0].mxu0
    %v329 = vadd.f32 %v222, %v328
    %v330 = vpop.f32.mrb[0].mxu0
    %v331 = vadd.f32 %v227, %v330
    %v332 = vpop.f32.mrb[0].mxu0
    %v333 = vadd.f32 %v227, %v332
    %334 = vmatprep.mubr.bf16.mxu0 0
    %335 = vmatmul.mubr.bf16.gmra.mrb[0].mxu0 %v284
    %v336 = vpop.f32.mrb[0].mxu0
    %v337 = vadd.f32 %v232, %v336
    %v338 = vpop.f32.mrb[0].mxu0
    %v339 = vadd.f32 %v232, %v338
    %v340 = vpop.f32.mrb[0].mxu0
    %v341 = vadd.f32 %v237, %v340
    %v342 = vpop.f32.mrb[0].mxu0
    %v343 = vadd.f32 %v237, %v342
    %344 = vmatprep.mubr.bf16.mxu0 0
    %345 = vmatmul.mubr.bf16.gmra.mrb[0].mxu0 %v287
    %v346 = vpop.f32.mrb[0].mxu0
    %v347 = vadd.f32 %v242, %v346
    %v348 = vpop.f32.mrb[0].mxu0
    %v349 = vadd.f32 %v242, %v348
    %v350 = vpop.f32.mrb[0].mxu0
    %v351 = vadd.f32 %v247, %v350
    %v352 = vpop.f32.mrb[0].mxu0
    %v353 = vadd.f32 %v247, %v352
    %354 = vmatprep.mubr.bf16.mxu0 0
    %355 = vmatmul.mubr.bf16.gmra.mrb[0].mxu0 %v290
    %v356 = vpop.f32.mrb[0].mxu0
    %v357 = vadd.f32 %v252, %v356
    %v358 = vpop.f32.mrb[0].mxu0
    %v359 = vadd.f32 %v252, %v358
    %v360 = vpop.f32.mrb[0].mxu0
    %v361 = vadd.f32 %v257, %v360
    %v362 = vpop.f32.mrb[0].mxu0
    %v363 = vadd.f32 %v257, %v362
    %364 = vdwg.mxu0
    %v365 = vpack.c.bf16 %v331, %v327
    %v366 = vpack.c.bf16 %v333, %v329
    %v367 = vpack.c.bf16 %v341, %v337
    %v368 = vpack.c.bf16 %v343, %v339
    %v369 = vpack.c.bf16 %v351, %v347
    %v370 = vpack.c.bf16 %v353, %v349
    %v371 = vpack.c.bf16 %v361, %v357
    %v372 = vpack.c.bf16 %v363, %v359
    %v373 = vmax.bf16 %v365, 0
    %v374 = vmax.bf16 %v366, 0
    %v375 = vmax.bf16 %v367, 0
    %v376 = vmax.bf16 %v368, 0
    %v377 = vmax.bf16 %v369, 0
    %v378 = vmax.bf16 %v370, 0
    %v379 = vmax.bf16 %v371, 0
    %v380 = vmax.bf16 %v372, 0
    %382 = vset.pattern.permute.xlu0 0
    %383 = vperm.xlu0 %382, %v50
    %v384 = vpop.permute.xlu0 %383
    %v387 = vsel %vm279, %v49, 0
    %389 = vmatprep.subr.bf16.mxu0 %v374
    %390 = vmatpush1.bf16.msra.mxu0 %v373
    %391 = vmatprep.subr.bf16.mxu0 %v376
    %392 = vmatpush1.bf16.msra.mxu0 %v375
    %393 = vmatprep.subr.bf16.mxu0 %v378
    %394 = vmatpush1.bf16.msra.mxu0 %v377
    %395 = vmatprep.subr.bf16.mxu0 %v380
    %396 = vmatpush1.bf16.msra.mxu0 %v379
    %397 = vmatprep.subr.bf16.mxu0 0
    %398 = vmatpush1.bf16.msra.mxu0 0
    %399 = vmatprep.subr.bf16.mxu0 0
    %400 = vmatpush1.bf16.msra.mxu0 0
    %401 = vmatprep.subr.bf16.mxu0 0
    %402 = vmatpush1.bf16.msra.mxu0 0
    %403 = vmatprep.subr.bf16.mxu0 0
    %404 = vmatpush1.bf16.msra.mxu0 0
    %405 = vmatprep.subr.bf16.mxu0 0
    %406 = vmatpush1.bf16.msra.mxu0 0
    %407 = vmatprep.subr.bf16.mxu0 0
    %408 = vmatpush1.bf16.msra.mxu0 0
    %409 = vmatprep.subr.bf16.mxu0 0
    %410 = vmatpush1.bf16.msra.mxu0 0
    %411 = vmatprep.subr.bf16.mxu0 0
    %412 = vmatpush1.bf16.msra.mxu0 0
    %413 = vmatprep.subr.bf16.mxu0 0
    %414 = vmatpush1.bf16.msra.mxu0 0
    %415 = vmatprep.subr.bf16.mxu0 0
    %416 = vmatpush1.bf16.msra.mxu0 0
    %417 = vmatprep.subr.bf16.mxu0 0
    %418 = vmatpush1.bf16.msra.mxu0 0
    %419 = vmatprep.subr.bf16.mxu0 0
    %420 = vmatpush1.bf16.msra.mxu0 0
    %421 = vmatprep.mubr.bf16.mxu0 0
    %422 = vmatmul.mubr.bf16.gmra.mrb[0].mxu0 %v387
    %v423 = vpop.f32.mrb[0].mxu0
    %v424 = vadd.f32 %v384, %v423
    %v425 = vpop.f32.mrb[0].mxu0
    %v426 = vadd.f32 %v384, %v425
    %v427 = vpop.f32.mrb[0].mxu0
    %v428 = vpop.f32.mrb[0].mxu0
    %429 = vdwg.mxu0
    %v432 = vcombine.low %v424, %v426
    %v434 = vunpack.c.l.s4 1983009808
    %v435 = vunpack.c.0.s8 %v434
    %v436 = vlaneseq
    %v437 = vshrl.u32 %v436, 7
    %v438 = vsub.s32 %v435, %v437
    %v439 = vrot.slane %v432, %v438
    %441 = vst [vmem:[#allocation2] sm:$0xf] %v439
    // Predicated region
    $region26: #{tpu_custom_call.1} parent=1 // pred_check
      _
    $region27: #{tpu_custom_call.1} parent=1 // pred_check_branch
      %443 = sbr.rel (0) target = $region29
    $region28: #{tpu_custom_call.1} parent=1 // pred_region
      %s445 = ssub.s32 64, 64
      %446 = vsyncadd [#allocation3], %s445
      %s448 = sshll.u32 [#allocation2], 4
      %s449 = int_to_ptr.vmem [resolvable:$true] %s448
      %451 = dma.vmem_to_hbm [thread:$0]  %s449, 64, %s6, [#allocation3]
    $region29: #{tpu_custom_call.1} parent=1 // pred_fallthru
      _
    // Predicated region
    $region30: #{tpu_custom_call.1} parent=1 // pred_check
      _
    $region31: #{tpu_custom_call.1} parent=1 // pred_check_branch
      %453 = sbr.rel (0) target = $region33
    $region32: #{tpu_custom_call.1} parent=1 // pred_region
      %454 = dma.done [#allocation3], 64
    $region33: #{tpu_custom_call.1} parent=1 // pred_fallthru
      _
    %455 = vsyncpa [#allocation3], 1

</llo_original>
